<compile_context>
chip_gen: v7x
topology: tpu7x:2x2x1
jax: 0.10.0
libtpu: 0.0.40
codegen_flags: <defaults>
</compile_context>

<pallas_src>
import functools
import math

import jax
import jax.numpy as jnp
from jax.experimental import pallas as pl
from jax.experimental.pallas import tpu as pltpu


def _packed_gather_kernel(idx_ref, wbd_ref, out_ref, *, n_imgs: int, pack: int):
    # idx_ref: (mb, pack)                int32   pack consecutive indices per row
    # wbd_ref: (pack*n_imgs, pack*d)     f32     block-diagonal table (grid-invariant)
    # out_ref: (mb, pack*d)              f32     row-major packed output (lane-dense)
    idx = idx_ref[...]
    mb = idx.shape[0]
    cols = pack * n_imgs
    col_ids = jax.lax.broadcasted_iota(jnp.int32, (mb, cols), 1)
    onehot = jnp.zeros((mb, cols), dtype=jnp.float32)
    for p in range(pack):                       # static, tiny loop (pack = 4 here)
        col = idx[:, p:p + 1]                   # (mb, 1)
        valid = jnp.logical_and(col >= 0, col < n_imgs)      # OOB -> zero row
        hit = jnp.logical_and(col + p * n_imgs == col_ids, valid)
        onehot = onehot + hit.astype(jnp.float32)
    # Exact for 0/1 multipliers with f32 accumulation -- do NOT downcast.
    out_ref[...] = jnp.dot(
        onehot, wbd_ref[...], preferred_element_type=jnp.float32
    ).astype(out_ref.dtype)


@functools.partial(jax.jit, static_argnames=("n_imgs", "pack", "max_block_n"))
def _pallas_embed(idxs, weight_bd, *, n_imgs: int, pack: int, max_block_n: int):
    """Fully fused pad -> pallas gather -> un-pad -> reshape (single dispatch)."""
    d = weight_bd.shape[1] // pack
    orig_shape = idxs.shape
    flat = idxs.reshape(-1).astype(jnp.int32)
    n = flat.shape[0]

    unit = 8 * pack                                   # keeps sublane dim % 8 == 0
    block_n = min(max_block_n, -(-n // unit) * unit)  # adaptive, <= 8192 by default
    padded = -(-n // block_n) * block_n
    if padded != n:
        flat = jnp.pad(flat, (0, padded - n))         # pad idx 0 (valid), sliced off

    m_total = padded // pack
    mb = block_n // pack
    idx2d = flat.reshape(m_total, pack)

    kernel = functools.partial(_packed_gather_kernel, n_imgs=n_imgs, pack=pack)
    out = pl.pallas_call(
        kernel,
        out_shape=jax.ShapeDtypeStruct((m_total, pack * d), weight_bd.dtype),
        grid=(padded // block_n,),
        in_specs=[
            pl.BlockSpec((mb, pack), lambda i: (i, 0)),               # index block
            pl.BlockSpec((pack * n_imgs, pack * d), lambda i: (0, 0)),  # full table
        ],
        out_specs=pl.BlockSpec((mb, pack * d), lambda i: (i, 0)),
        compiler_params=pltpu.CompilerParams(
            dimension_semantics=("parallel",),        # independent output blocks
        ),
        cost_estimate=pl.CostEstimate(
            flops=2 * padded * n_imgs * pack * d,
            transcendentals=0,
            bytes_accessed=padded * 4 + padded * d * 4
            + (pack * n_imgs) * (pack * d) * 4,
        ),
    )(idx2d, weight_bd)

    # (m_total, pack*d) is bit-identical to (padded, d) row-major: metadata only.
    out = out.reshape(padded, d)[:n]
    return out.reshape(*orig_shape, d)


class AppearanceEmbedding:
    """JAX/Pallas port of the PyTorch AppearanceEmbedding module."""

    def __init__(self, n_imgs: int, n_component: int, key, *, max_block_n: int = 8192):
        self.n_imgs = n_imgs
        self.n_component = n_component
        # nn.Embedding default init: N(0, 1)
        self.weight = jax.random.normal(key, (n_imgs, n_component), jnp.float32)

        # Pack `pack` consecutive lookups per kernel row so the output block's
        # last dim is a multiple of 128 (unmasked lane-dense stores) and the
        # row-major (N, d) layout falls straight out of the kernel.
        pack = 128 // math.gcd(n_component, 128)
        if pack * n_imgs * pack * n_component * 4 > (2 << 20):
            # TODO(synk): for awkward d / huge tables use a scalar-prefetch row
            # gather instead of widening the block-diagonal one-hot matmul.
            pack = 1
        self.pack = pack
        self.max_block_n = max_block_n
        # Block-diagonal table (pack*n_imgs, pack*d), built once at init.
        self.weight_bd = jnp.kron(jnp.eye(pack, dtype=self.weight.dtype), self.weight)

    def __call__(self, idxs=None, xyz_sampled=None, app_code=None,
                 min_pallas_size: int = 65536):
        if idxs is not None:
            idxs = jnp.asarray(idxs)
            n = math.prod(idxs.shape)
            if n < min_pallas_size:
                # Small batches: one native XLA gather beats pad + kernel launches.
                return jnp.take(self.weight, idxs, axis=0)
            return _pallas_embed(idxs, self.weight_bd, n_imgs=self.n_imgs,
                                 pack=self.pack, max_block_n=self.max_block_n)
        if app_code is not None:
            # Fast path: every lookup hits the same row -> pure broadcast; no
            # kernel, no index materialization, no padding.
            row = self.weight[jnp.asarray(app_code, dtype=jnp.int32)]
            return jnp.broadcast_to(row, (*xyz_sampled.shape[:-1], self.n_component))
        return None


if __name__ == "__main__":
    key = jax.random.PRNGKey(0)
    k_w, k_idx, k_idx2, k_xyz = jax.random.split(key, 4)

    n_imgs, n_component = 16, 32
    module = AppearanceEmbedding(n_imgs, n_component, k_w)

    # Path 1: explicit indices, small shape, forced through the Pallas kernel.
    idxs = jax.random.randint(k_idx, (2, 8), 0, n_imgs, dtype=jnp.int32)
    out1 = jax.block_until_ready(module(idxs=idxs, min_pallas_size=0))
    ref1 = module.weight[idxs]
    assert out1.shape == (2, 8, n_component)
    assert jnp.allclose(out1, ref1), "idxs Pallas path mismatch"

    # Path 2: multi-block Pallas run (>= 2 grid steps -> megacore-shardable).
    idxs2 = jax.random.randint(k_idx2, (4, 4096), 0, n_imgs, dtype=jnp.int32)
    out2 = jax.block_until_ready(module(idxs=idxs2, min_pallas_size=0))
    ref2 = module.weight[idxs2]
    assert out2.shape == (4, 4096, n_component)
    assert jnp.allclose(out2, ref2), "multi-block Pallas path mismatch"

    # Path 3: app_code branch -> broadcast fast path (no kernel needed).
    xyz_sampled = jax.random.normal(k_xyz, (2, 8, 3), jnp.float32)
    out3 = jax.block_until_ready(module(xyz_sampled=xyz_sampled, app_code=3))
    ref3 = jnp.broadcast_to(module.weight[3], (2, 8, n_component))
    assert out3.shape == (2, 8, n_component)
    assert jnp.allclose(out3, ref3), "app_code path mismatch"

    # Path 4: default dispatch at small N -> jnp.take fast path.
    out4 = jax.block_until_ready(module(idxs=idxs))
    assert jnp.allclose(out4, ref1), "small-N take path mismatch"

    print("KERNEL_OK")
</pallas_src>

<mosaic_0001>
module attributes {stable_mosaic.version = 11 : i64} {
  func.func @_packed_gather_kernel(%arg0: i32, %arg1: memref<8x4xi32, #tpu.memory_space<vmem>>, %arg2: memref<64x128xf32, #tpu.memory_space<vmem>>, %arg3: memref<8x128xf32, #tpu.memory_space<vmem>>) attributes {dimension_semantics = [#tpu.dimension_semantics<parallel>], iteration_bounds = array<i64: 1>, scalar_prefetch = 0 : i64, scratch_operands = 0 : i64, tpu.core_type = #tpu.core_type<tc>, window_params = [{transform_indices = @transform_0, window_bounds = array<i64: 8, 4>}, {pipeline_mode = #tpu.pipeline_mode<synchronous>, transform_indices = @transform_1, window_bounds = array<i64: 64, 128>}, {transform_indices = @transform_2, window_bounds = array<i64: 8, 128>}]} {
    %c0 = arith.constant 0 : index
    %c0_0 = arith.constant 0 : index
    %0 = vector.load %arg1[%c0, %c0_0] : memref<8x4xi32, #tpu.memory_space<vmem>>, vector<8x4xi32>
    %1 = tpu.iota {dimensions = array<i32: 1>} : vector<8x64xi32>
    %cst = arith.constant 0.000000e+00 : f32
    %2 = vector.broadcast %cst : f32 to vector<8x64xf32>
    %3 = vector.extract_strided_slice %0 {offsets = [0, 0], sizes = [8, 1], strides = [1, 1]} : vector<8x4xi32> to vector<8x1xi32>
    %c0_i32 = arith.constant 0 : i32
    %4 = vector.broadcast %c0_i32 : i32 to vector<8x1xi32>
    %5 = arith.cmpi sge, %3, %4 : vector<8x1xi32>
    %c16_i32 = arith.constant 16 : i32
    %6 = vector.broadcast %c16_i32 : i32 to vector<8x1xi32>
    %7 = arith.cmpi slt, %3, %6 : vector<8x1xi32>
    %8 = arith.andi %5, %7 : vector<8x1xi1>
    %c0_i32_1 = arith.constant 0 : i32
    %9 = vector.broadcast %c0_i32_1 : i32 to vector<8x1xi32>
    %10 = arith.addi %3, %9 : vector<8x1xi32>
    %11 = vector.broadcast %10 : vector<8x1xi32> to vector<8x64xi32>
    %12 = arith.cmpi eq, %11, %1 : vector<8x64xi32>
    %13 = vector.broadcast %8 : vector<8x1xi1> to vector<8x64xi1>
    %14 = arith.andi %12, %13 : vector<8x64xi1>
    %15 = arith.extui %14 : vector<8x64xi1> to vector<8x64xi32>
    %16 = arith.sitofp %15 : vector<8x64xi32> to vector<8x64xf32>
    %17 = arith.addf %2, %16 : vector<8x64xf32>
    %18 = vector.extract_strided_slice %0 {offsets = [0, 1], sizes = [8, 1], strides = [1, 1]} : vector<8x4xi32> to vector<8x1xi32>
    %c0_i32_2 = arith.constant 0 : i32
    %19 = vector.broadcast %c0_i32_2 : i32 to vector<8x1xi32>
    %20 = arith.cmpi sge, %18, %19 : vector<8x1xi32>
    %c16_i32_3 = arith.constant 16 : i32
    %21 = vector.broadcast %c16_i32_3 : i32 to vector<8x1xi32>
    %22 = arith.cmpi slt, %18, %21 : vector<8x1xi32>
    %23 = arith.andi %20, %22 : vector<8x1xi1>
    %c16_i32_4 = arith.constant 16 : i32
    %24 = vector.broadcast %c16_i32_4 : i32 to vector<8x1xi32>
    %25 = arith.addi %18, %24 : vector<8x1xi32>
    %26 = vector.broadcast %25 : vector<8x1xi32> to vector<8x64xi32>
    %27 = arith.cmpi eq, %26, %1 : vector<8x64xi32>
    %28 = vector.broadcast %23 : vector<8x1xi1> to vector<8x64xi1>
    %29 = arith.andi %27, %28 : vector<8x64xi1>
    %30 = arith.extui %29 : vector<8x64xi1> to vector<8x64xi32>
    %31 = arith.sitofp %30 : vector<8x64xi32> to vector<8x64xf32>
    %32 = arith.addf %17, %31 : vector<8x64xf32>
    %33 = vector.extract_strided_slice %0 {offsets = [0, 2], sizes = [8, 1], strides = [1, 1]} : vector<8x4xi32> to vector<8x1xi32>
    %c0_i32_5 = arith.constant 0 : i32
    %34 = vector.broadcast %c0_i32_5 : i32 to vector<8x1xi32>
    %35 = arith.cmpi sge, %33, %34 : vector<8x1xi32>
    %c16_i32_6 = arith.constant 16 : i32
    %36 = vector.broadcast %c16_i32_6 : i32 to vector<8x1xi32>
    %37 = arith.cmpi slt, %33, %36 : vector<8x1xi32>
    %38 = arith.andi %35, %37 : vector<8x1xi1>
    %c32_i32 = arith.constant 32 : i32
    %39 = vector.broadcast %c32_i32 : i32 to vector<8x1xi32>
    %40 = arith.addi %33, %39 : vector<8x1xi32>
    %41 = vector.broadcast %40 : vector<8x1xi32> to vector<8x64xi32>
    %42 = arith.cmpi eq, %41, %1 : vector<8x64xi32>
    %43 = vector.broadcast %38 : vector<8x1xi1> to vector<8x64xi1>
    %44 = arith.andi %42, %43 : vector<8x64xi1>
    %45 = arith.extui %44 : vector<8x64xi1> to vector<8x64xi32>
    %46 = arith.sitofp %45 : vector<8x64xi32> to vector<8x64xf32>
    %47 = arith.addf %32, %46 : vector<8x64xf32>
    %48 = vector.extract_strided_slice %0 {offsets = [0, 3], sizes = [8, 1], strides = [1, 1]} : vector<8x4xi32> to vector<8x1xi32>
    %c0_i32_7 = arith.constant 0 : i32
    %49 = vector.broadcast %c0_i32_7 : i32 to vector<8x1xi32>
    %50 = arith.cmpi sge, %48, %49 : vector<8x1xi32>
    %c16_i32_8 = arith.constant 16 : i32
    %51 = vector.broadcast %c16_i32_8 : i32 to vector<8x1xi32>
    %52 = arith.cmpi slt, %48, %51 : vector<8x1xi32>
    %53 = arith.andi %50, %52 : vector<8x1xi1>
    %c48_i32 = arith.constant 48 : i32
    %54 = vector.broadcast %c48_i32 : i32 to vector<8x1xi32>
    %55 = arith.addi %48, %54 : vector<8x1xi32>
    %56 = vector.broadcast %55 : vector<8x1xi32> to vector<8x64xi32>
    %57 = arith.cmpi eq, %56, %1 : vector<8x64xi32>
    %58 = vector.broadcast %53 : vector<8x1xi1> to vector<8x64xi1>
    %59 = arith.andi %57, %58 : vector<8x64xi1>
    %60 = arith.extui %59 : vector<8x64xi1> to vector<8x64xi32>
    %61 = arith.sitofp %60 : vector<8x64xi32> to vector<8x64xf32>
    %62 = arith.addf %47, %61 : vector<8x64xf32>
    %c0_9 = arith.constant 0 : index
    %c0_10 = arith.constant 0 : index
    %63 = vector.load %arg2[%c0_9, %c0_10] : memref<64x128xf32, #tpu.memory_space<vmem>>, vector<64x128xf32>
    %cst_11 = arith.constant dense<0.000000e+00> : vector<8x128xf32>
    %64 = tpu.matmul %62, %63, %cst_11 {dimension_numbers = #tpu.dot_dimension_numbers<[1], [0], [0], [1], [0, 0, 1, 1], [], []>} : vector<8x64xf32>, vector<64x128xf32>, vector<8x128xf32> -> vector<8x128xf32>
    %c0_12 = arith.constant 0 : index
    %c0_13 = arith.constant 0 : index
    %65 = vector.load %arg3[%c0_12, %c0_13] : memref<8x128xf32, #tpu.memory_space<vmem>>, vector<8x128xf32>
    tpu.vector_store %arg3[%c0_12, %c0_13], %64 {strides = array<i32>} : memref<8x128xf32, #tpu.memory_space<vmem>>, vector<8x128xf32>,
    return
  }
  func.func @transform_0(%arg0: i32) -> (i32, i32) {
    %c0_i32 = arith.constant 0 : i32
    %c0_i32_0 = arith.constant 0 : i32
    return %arg0, %c0_i32 : i32, i32
  }
  func.func @transform_1(%arg0: i32) -> (i32, i32) {
    %c0_i32 = arith.constant 0 : i32
    %c0_i32_0 = arith.constant 0 : i32
    %c0_i32_1 = arith.constant 0 : i32
    return %c0_i32, %c0_i32_0 : i32, i32
  }
  func.func @transform_2(%arg0: i32) -> (i32, i32) {
    %c0_i32 = arith.constant 0 : i32
    %c0_i32_0 = arith.constant 0 : i32
    return %arg0, %c0_i32 : i32, i32
  }
}

</mosaic_0001>

<llo_original>
// kernel: _pallas_embed.1
$region0: #{_pallas_embed.1}
  #allocation0 [shape = 'u32[]', space=smem, size = 0x4, offset = 0x4, fixed_abs, tag = 'smem constant byte address 0x4 - core index']
  #allocation1 [shape = 'u32[144,128]{1,0:T(1,128)}', space=vmem, size = 0x12000, scoped, tag = 'internal scratch']
  %s0 = inlined_call_operand.vmem [shape: s32[8,4], index: 0, kind: input, shape index: {}]
  %s1 = inlined_call_operand.hbm [shape: f32[64,128], index: 1, kind: input, shape index: {}]
  %s2 = inlined_call_operand.vmem [shape: f32[8,128], index: 2, kind: output, shape index: {}]
  %s3 = sld [smem:[#allocation0]]
  $region22: #{_pallas_embed.1} parent=0
    _
  %s5 = ssub.s32 1, %s3
  %s6 = scalar_select 0, %s5, %s3
  $region1: #{_pallas_embed.1} parent=0
    #allocation2 [shape = 'u8[32768]{0}', space=vmem, size = 0x8000, scoped, tag = 'input window, operand 1, single buffered']
    #allocation3 [shape = 's32[1]{0}', space=sflag, size = 0x4, scoped, tag = 'scoped memory for _pallas_embed.1']
    %7 = vsyncpa [#allocation3], 0
    // Predicated region
    $region2: #{_pallas_embed.1} parent=1 // pred_check
      _
    $region3: #{_pallas_embed.1} parent=1 // pred_check_branch
      %9 = sbr.rel (0) target = $region5
    $region4: #{_pallas_embed.1} parent=1 // pred_region
      _
    $region5: #{_pallas_embed.1} parent=1 // pred_fallthru
      _
    // Predicated region
    $region6: #{_pallas_embed.1} parent=1 // pred_check
      _
    $region7: #{_pallas_embed.1} parent=1 // pred_check_branch
      %11 = sbr.rel (0) target = $region9
    $region8: #{_pallas_embed.1} parent=1 // pred_region
      %s13 = ssub.s32 1024, 1024
      %14 = vsyncadd [#allocation3], %s13
      %s15 = sshll.u32 [#allocation2], 4
      %s16 = int_to_ptr.vmem [resolvable:$true] %s15
      %21 = dma.hbm_to_vmem [thread:$0]  %s1, 1024, %s16, [#allocation3], 128, 128, 8
    $region9: #{_pallas_embed.1} parent=1 // pred_fallthru
      _
    // Predicated region
    $region10: #{_pallas_embed.1} parent=1 // pred_check
      _
    $region11: #{_pallas_embed.1} parent=1 // pred_check_branch
      %23 = sbr.rel (0) target = $region13
    $region12: #{_pallas_embed.1} parent=1 // pred_region
      %24 = dma.done [#allocation3], 1024
    $region13: #{_pallas_embed.1} parent=1 // pred_fallthru
      _
    %v25 = vld [vmem:[%s0] sm:$0xff]
    %v26 = vlaneseq
    %v27 = vand.u32 %v26, 127
    %vm28 = vcmp.ge.s32.totalorder %v25, 0
    %vm29 = vcmp.lt.s32.totalorder %v25, 16
    %vm30 = vmand %vm28, %vm29
    %31 = vset.pattern.permute.xlu0 0
    %32 = vperm.xlu0 %31, %v25
    %v33 = vpop.permute.xlu0 %32
    %vm34 = vcmp.eq.s32.totalorder %v33, %v27
    %v35 = vsel %vm30, 1, 0
    %36 = vset.pattern.permute.xlu0 0
    %37 = vperm.xlu0 %36, %v35
    %v38 = vpop.permute.xlu0 %37
    %vm39 = vcmp.eq.s32.totalorder %v38, 1
    %vm40 = vmand %vm34, %vm39
    %v41 = vsel %vm40, 1, 0
    %v42 = vcvt.s32.f32 %v41
    %v43 = vadd.f32 %v42, 0.0
    %v44 = vadd.s32 %v25, 16
    %45 = vset.pattern.permute.xlu0 1
    %46 = vperm.xlu0 %45, %v44
    %v47 = vpop.permute.xlu0 %46
    %vm48 = vcmp.eq.s32.totalorder %v47, %v27
    %49 = vset.pattern.permute.xlu0 1
    %50 = vperm.xlu0 %49, %v35
    %v51 = vpop.permute.xlu0 %50
    %vm52 = vcmp.eq.s32.totalorder %v51, 1
    %vm53 = vmand %vm48, %vm52
    %v54 = vsel %vm53, 1, 0
    %v55 = vcvt.s32.f32 %v54
    %v56 = vadd.f32 %v43, %v55
    %v57 = vadd.s32 %v25, 32
    %58 = vset.pattern.permute.xlu0 2
    %59 = vperm.xlu0 %58, %v57
    %v60 = vpop.permute.xlu0 %59
    %vm61 = vcmp.eq.s32.totalorder %v60, %v27
    %62 = vset.pattern.permute.xlu0 2
    %63 = vperm.xlu0 %62, %v35
    %v64 = vpop.permute.xlu0 %63
    %vm65 = vcmp.eq.s32.totalorder %v64, 1
    %vm66 = vmand %vm61, %vm65
    %v67 = vsel %vm66, 1, 0
    %v68 = vcvt.s32.f32 %v67
    %v69 = vadd.f32 %v56, %v68
    %v70 = vadd.s32 %v25, 48
    %71 = vset.pattern.permute.xlu0 3
    %72 = vperm.xlu0 %71, %v70
    %v73 = vpop.permute.xlu0 %72
    %vm74 = vcmp.eq.s32.totalorder %v73, %v27
    %75 = vset.pattern.permute.xlu0 3
    %76 = vperm.xlu0 %75, %v35
    %v77 = vpop.permute.xlu0 %76
    %vm78 = vcmp.eq.s32.totalorder %v77, 1
    %vm79 = vmand %vm74, %vm78
    %v80 = vsel %vm79, 1, 0
    %v81 = vcvt.s32.f32 %v80
    %v82 = vadd.f32 %v69, %v81
    %v83 = vld [vmem:[#allocation2] sm:$0xff]
    %v84 = vld [vmem:[#allocation2 + $0x8] sm:$0xff]
    %v85 = vld [vmem:[#allocation2 + $0x10] sm:$0xff]
    %v86 = vld [vmem:[#allocation2 + $0x18] sm:$0xff]
    %v87 = vld [vmem:[#allocation2 + $0x20] sm:$0xff]
    %v88 = vld [vmem:[#allocation2 + $0x28] sm:$0xff]
    %v89 = vld [vmem:[#allocation2 + $0x30] sm:$0xff]
    %v90 = vld [vmem:[#allocation2 + $0x38] sm:$0xff]
    %vm91 = vcmask 523264
    %v93 = vsel %vm91, %v82, 0
    %95 = vmatprep.subr.mxu0 0.0
    %96 = vmatpush1.msra.mxu0 %v83
    %97 = vmatprep.subr.mxu0 0.0
    %98 = vmatpush1.msra.mxu0 %v84
    %99 = vmatprep.subr.mxu0 0.0
    %100 = vmatpush1.msra.mxu0 %v85
    %101 = vmatprep.subr.mxu0 0.0
    %102 = vmatpush1.msra.mxu0 %v86
    %103 = vmatprep.subr.mxu0 0.0
    %104 = vmatpush1.msra.mxu0 %v87
    %105 = vmatprep.subr.mxu0 0.0
    %106 = vmatpush1.msra.mxu0 %v88
    %107 = vmatprep.subr.mxu0 0.0
    %108 = vmatpush1.msra.mxu0 %v89
    %109 = vmatprep.subr.mxu0 0.0
    %110 = vmatpush1.msra.mxu0 %v90
    %111 = vmatprep.subr.mxu0 0.0
    %112 = vmatpush1.msra.mxu0 0.0
    %113 = vmatprep.subr.mxu0 0.0
    %114 = vmatpush1.msra.mxu0 0.0
    %115 = vmatprep.subr.mxu0 0.0
    %116 = vmatpush1.msra.mxu0 0.0
    %117 = vmatprep.subr.mxu0 0.0
    %118 = vmatpush1.msra.mxu0 0.0
    %119 = vmatprep.subr.mxu0 0.0
    %120 = vmatpush1.msra.mxu0 0.0
    %121 = vmatprep.subr.mxu0 0.0
    %122 = vmatpush1.msra.mxu0 0.0
    %123 = vmatprep.subr.mxu0 0.0
    %124 = vmatpush1.msra.mxu0 0.0
    %125 = vmatprep.subr.mxu0 0.0
    %126 = vmatpush1.msra.mxu0 0.0
    %127 = vmatprep.subr.mxu0 0.0
    %128 = vmatpush1.msra.mxu0 0.0
    %129 = vmatprep.subr.mxu0 0.0
    %130 = vmatpush1.msra.mxu0 0.0
    %131 = vmatprep.subr.mxu0 0.0
    %132 = vmatpush1.msra.mxu0 0.0
    %133 = vmatprep.subr.mxu0 0.0
    %134 = vmatpush1.msra.mxu0 0.0
    %135 = vmatprep.subr.mxu0 0.0
    %136 = vmatpush1.msra.mxu0 0.0
    %137 = vmatprep.subr.mxu0 0.0
    %138 = vmatpush1.msra.mxu0 0.0
    %139 = vmatprep.subr.mxu0 0.0
    %140 = vmatpush1.msra.mxu0 0.0
    %141 = vmatprep.subr.mxu0 0.0
    %142 = vmatpush1.msra.mxu0 0.0
    %143 = vmatprep.subr.mxu0 0.0
    %144 = vmatpush1.msra.mxu0 0.0
    %145 = vmatprep.subr.mxu0 0.0
    %146 = vmatpush1.msra.mxu0 0.0
    %147 = vmatprep.subr.mxu0 0.0
    %148 = vmatpush1.msra.mxu0 0.0
    %149 = vmatprep.subr.mxu0 0.0
    %150 = vmatpush1.msra.mxu0 0.0
    %151 = vmatprep.subr.mxu0 0.0
    %152 = vmatpush1.msra.mxu0 0.0
    %153 = vmatprep.subr.mxu0 0.0
    %154 = vmatpush1.msra.mxu0 0.0
    %155 = vmatprep.subr.mxu0 0.0
    %156 = vmatpush1.msra.mxu0 0.0
    %157 = vmatprep.subr.mxu0 0.0
    %158 = vmatpush1.msra.mxu0 0.0
    %159 = vmatprep.mubr.f32.mxu0 0.0
    %160 = vmatmul.mubr.f32.gmra.mrb[0].mxu0 %v93
    %v161 = vpop.f32.mrb[0].mxu0
    %v162 = vadd.f32 0.0, %v161
    %v163 = vpop.f32.mrb[0].mxu0
    %164 = vdwg.mxu0
    %165 = vst [vmem:[%s2] sm:$0xff] %v162
    // Predicated region
    $region14: #{_pallas_embed.1} parent=1 // pred_check
      _
    $region15: #{_pallas_embed.1} parent=1 // pred_check_branch
      %167 = sbr.rel (0) target = $region17
    $region16: #{_pallas_embed.1} parent=1 // pred_region
      _
    $region17: #{_pallas_embed.1} parent=1 // pred_fallthru
      _
    // Predicated region
    $region18: #{_pallas_embed.1} parent=1 // pred_check
      _
    $region19: #{_pallas_embed.1} parent=1 // pred_check_branch
      %169 = sbr.rel (0) target = $region21
    $region20: #{_pallas_embed.1} parent=1 // pred_region
      _
    $region21: #{_pallas_embed.1} parent=1 // pred_fallthru
      _
    %170 = vsyncpa [#allocation3], 1

</llo_original>
